<compile_context>
chip_gen: v5e
topology: v5e:2x2
jax: 0.10.0
libtpu: 0.0.40
codegen_flags: <defaults>
</compile_context>

<pallas_src>
import jax
import jax.numpy as jnp
from jax.experimental import pallas as pl
from jax.experimental.pallas import tpu as pltpu

_LANE = 128


def _round_up(x, m):
    return (x + m - 1) // m * m


# --------------------------------------------------------------------------
# generation-aware configuration (safe fallbacks: v7x-conservative defaults)
# --------------------------------------------------------------------------
def _tpu_config():
    """Returns (vmem_capacity_bytes, tensorcores_per_chip, target_mxu_rows)."""
    vmem_cap = 64 << 20          # conservative default = v7x per-TC VMEM
    num_cores = 1                # v5e / v6e: one TensorCore per chip
    target_rows = 256            # MXU M target on v6e/v7x (256-wide MXU)
    try:
        info = pltpu.get_tpu_info()
        vmem_cap = int(getattr(info, "vmem_capacity_bytes", vmem_cap))
    except Exception:
        pass
    try:
        kind = jax.devices()[0].device_kind.lower()
        if "v7" in kind:
            num_cores = 2        # v7x: 2 TensorCores share the chip
        if "v5" in kind and ("lite" in kind or "v5e" in kind):
            target_rows = 128    # v5e: 128-wide MXU
    except Exception:
        pass
    return vmem_cap, num_cores, target_rows


def _per_step_vmem_bytes(bt, N, Kp, G, Du, in_bytes=2, out_bytes=4):
    """Double-buffered DMA blocks + rough headroom for f32 intermediates."""
    dma = (2 * (bt * N * Kp + bt * N * Du + bt * N * N
                + Kp * G + Du * Du) * in_bytes
           + 2 * G * 4
           + 2 * bt * N * Du * out_bytes)
    intermediates = bt * N * (Kp + G + 4 * Du) * 4
    return dma + intermediates


def _pick_batch_block(B, N, fits, num_cores, target_rows):
    divs = [d for d in range(1, B + 1) if B % d == 0]
    feasible = [d for d in divs if fits(d)] or [1]
    if num_cores > 1:
        # keep >= 2 pipelined grid steps per TensorCore when the batch allows
        piped = [d for d in feasible if B // d >= 2 * num_cores]
        if piped:
            feasible = piped
    # smallest bt that already fills the MXU M dimension; otherwise the largest
    big = [d for d in feasible if d * N >= target_rows]
    return min(big) if big else max(feasible)


# --------------------------------------------------------------------------
# kernel
# --------------------------------------------------------------------------
def _gcgru_kernel(xh_ref, h_ref, a_ref, w_ref, wch_ref, b_ref, out_ref):
    xh = xh_ref[...]                      # (Bt, N, Kp)  bf16, zero-padded [x|h]
    h = h_ref[...]                        # (Bt, N, Du)  bf16
    A = a_ref[...]                        # (Bt, N, N)   bf16
    W = w_ref[...]                        # (Kp, G)      bf16, cols [Wr|Wu|Wc_x]
    Wch = wch_ref[...]                    # (Du, Du)     bf16
    b = b_ref[...]                        # (1, G)       f32, [br|bu|bc]

    bt, n, kp = xh.shape
    du = h.shape[-1]
    g_dim = W.shape[-1]

    hf = h.astype(jnp.float32)

    # 1) fused graph aggregation  A @ [x | h]   (one batched bf16 MXU pass)
    axh = jnp.einsum('bij,bjk->bik', A, xh,
                     preferred_element_type=jnp.float32)        # (Bt, N, Kp) f32
    axh = axh.astype(jnp.bfloat16)

    # 2) fused 3-gate matmul: r | u | c_x in the first 3*Du output columns
    g = jnp.dot(axh.reshape(bt * n, kp), W,
                preferred_element_type=jnp.float32)
    g = g.reshape(bt, n, g_dim) + b                              # (Bt, N, G) f32

    # sigmoid via a single EUP tanh per element (identical math)
    ru = 0.5 * jnp.tanh(0.5 * g[..., :2 * du]) + 0.5
    r = ru[..., :du]
    u = ru[..., du:2 * du]
    cx = g[..., 2 * du:3 * du]                                   # ax @ Wc_x + bc

    # 3) second graph aggregation on the gated hidden state:  A @ (r*h)
    rh = (r * hf).astype(jnp.bfloat16)
    arh = jnp.einsum('bij,bjk->bik', A, rh,
                     preferred_element_type=jnp.float32)         # (Bt, N, Du)
    arh = arh.astype(jnp.bfloat16)

    # 4) candidate and state update
    ch = jnp.dot(arh.reshape(bt * n, du), Wch,
                 preferred_element_type=jnp.float32).reshape(bt, n, du)
    c = jnp.tanh(cx + ch)
    out_ref[...] = (u * hf + (1.0 - u) * c).astype(out_ref.dtype)


# --------------------------------------------------------------------------
# one-time parameter packing (hoisted out of the per-step call)
# --------------------------------------------------------------------------
def pack_gcgru_params(params, input_dim, rnn_units, compute_dtype=jnp.bfloat16):
    """Pack PyTorch-style GRU gate weights into the kernel layout, once.

    Returns (W_all (Kp, G) bf16, Wc_h (Du, Du) bf16, b_all (1, G) f32) where
    Kp = round_up(Din+Du, 128), G = round_up(3*Du, 128) and the gate columns
    are packed contiguously at stride Du: [r | u | c_x | zero-pad].
    Padding is exactly zero (required for correctness of the padded lanes).
    """
    (wr_x, wr_h, br, wu_x, wu_h, bu, wc_x, wc_h, bc) = params
    Din, Du = input_dim, rnn_units
    Kp = _round_up(Din + Du, _LANE)
    G = _round_up(3 * Du, _LANE)

    W_all = jnp.zeros((Kp, G), jnp.float32)

    def put(W, col0, Wx, Wh):
        W = W.at[:Din, col0:col0 + Du].set(Wx)
        if Wh is not None:
            W = W.at[Din:Din + Du, col0:col0 + Du].set(Wh)
        return W

    W_all = put(W_all, 0, wr_x, wr_h)          # r gate
    W_all = put(W_all, Du, wu_x, wu_h)         # u gate
    W_all = put(W_all, 2 * Du, wc_x, None)     # x-part of candidate (h-part via A@(r*h))

    b_all = jnp.zeros((1, G), jnp.float32)
    b_all = b_all.at[:, 0:Du].set(br.reshape(1, Du))
    b_all = b_all.at[:, Du:2 * Du].set(bu.reshape(1, Du))
    b_all = b_all.at[:, 2 * Du:3 * Du].set(bc.reshape(1, Du))

    return (W_all.astype(compute_dtype), wc_h.astype(compute_dtype), b_all)


# --------------------------------------------------------------------------
# wrapper
# --------------------------------------------------------------------------
@jax.jit
def gcgru_cell(x, h, A, W_all, Wc_h, b_all):
    """x: (B,N,Din)  h: (B,N,Du)  A: (B,N,N)  packed weights from
    pack_gcgru_params  ->  new hidden state (B,N,Du) in x.dtype."""
    B, N, Din = x.shape
    Du = h.shape[-1]
    Kp, G = W_all.shape
    cdt = W_all.dtype                                   # bf16 compute dtype

    # activations: pad [x|h] to a lane-dense Kp, cast everything to bf16
    xh = jnp.concatenate([x, h], axis=-1)
    xh_p = jnp.pad(xh, ((0, 0), (0, 0), (0, Kp - (Din + Du)))).astype(cdt)
    h_c = h.astype(cdt)
    A_c = A.astype(cdt)

    # generation-aware batch-block / VMEM-budget selection (trace-time Python)
    vmem_cap, num_cores, target_rows = _tpu_config()
    budget = max(vmem_cap - (16 << 20), 16 << 20)       # leave DMA/compiler headroom
    bt = _pick_batch_block(
        B, N, lambda d: _per_step_vmem_bytes(d, N, Kp, G, Du) <= budget,
        num_cores, target_rows)
    need = _per_step_vmem_bytes(bt, N, Kp, G, Du)
    vmem_limit = int(max(min(max(2 * need, 32 << 20), budget), need + (4 << 20)))
    grid = (B // bt,)

    out = pl.pallas_call(
        _gcgru_kernel,
        out_shape=jax.ShapeDtypeStruct((B, N, Du), x.dtype),
        grid_spec=pltpu.PrefetchScalarGridSpec(
            num_scalar_prefetch=0,
            grid=grid,
            in_specs=[
                pl.BlockSpec((bt, N, Kp), lambda i: (i, 0, 0)),   # [x|h] padded, bf16
                pl.BlockSpec((bt, N, Du), lambda i: (i, 0, 0)),   # h, bf16
                pl.BlockSpec((bt, N, N), lambda i: (i, 0, 0)),    # A, bf16
                pl.BlockSpec((Kp, G), lambda i: (0, 0)),          # fused gate weights
                pl.BlockSpec((Du, Du), lambda i: (0, 0)),         # Wc_h
                pl.BlockSpec((1, G), lambda i: (0, 0)),           # fused bias (f32)
            ],
            out_specs=pl.BlockSpec((bt, N, Du), lambda i: (i, 0, 0)),
        ),
        compiler_params=pltpu.CompilerParams(
            dimension_semantics=("parallel",),
            vmem_limit_bytes=vmem_limit),
    )(xh_p, h_c, A_c, W_all, Wc_h, b_all)

    # NOTE: for recurrent use, carry `out` directly as the next h — it already
    # has the kernel's h-input layout, so no per-step re-layout is needed.
    return out


# --------------------------------------------------------------------------
# init + pure-JAX reference (PyTorch semantics)
# --------------------------------------------------------------------------
def init_params(key, input_dim, rnn_units):
    """Deterministic init mimicking nn.Linear(in=input_dim+rnn_units, out=rnn_units)."""
    in_features = input_dim + rnn_units
    bound = 1.0 / jnp.sqrt(in_features)
    keys = jax.random.split(key, 6)
    params = []
    for i in range(3):  # r, u, c gates
        W = jax.random.uniform(keys[2 * i], (rnn_units, in_features),
                               minval=-bound, maxval=bound, dtype=jnp.float32)
        b = jax.random.uniform(keys[2 * i + 1], (rnn_units,),
                               minval=-bound, maxval=bound, dtype=jnp.float32)
        # split + transpose: (out,in) -> x-part (Din,Du), h-part (Du,Du)
        Wx = W[:, :input_dim].T
        Wh = W[:, input_dim:].T
        params.extend([Wx, Wh, b.reshape(1, rnn_units)])
    return tuple(params)


def gcgru_reference(x, h, A, params):
    """Pure-JAX reference matching the PyTorch GCGRUCell forward exactly (f32)."""
    (wr_x, wr_h, br, wu_x, wu_h, bu, wc_x, wc_h, bc) = params
    xh = jnp.concatenate([x, h], axis=2)
    Wr = jnp.concatenate([wr_x, wr_h], axis=0)
    Wu = jnp.concatenate([wu_x, wu_h], axis=0)
    Wc = jnp.concatenate([wc_x, wc_h], axis=0)
    r = jax.nn.sigmoid(jnp.einsum('bij,bjk,kl->bil', A, xh, Wr) + br)
    u = jax.nn.sigmoid(jnp.einsum('bij,bjk,kl->bil', A, xh, Wu) + bu)
    xrh = jnp.concatenate([x, r * h], axis=2)
    c = jnp.tanh(jnp.einsum('bij,bjk,kl->bil', A, xrh, Wc) + bc)
    return u * h + (1.0 - u) * c


if __name__ == "__main__":
    B, N, input_dim, rnn_units = 2, 16, 4, 32

    key = jax.random.PRNGKey(0)
    k_x, k_h, k_a, k_p = jax.random.split(key, 4)

    x = jax.random.normal(k_x, (B, N, input_dim), dtype=jnp.float32)
    h = jax.random.normal(k_h, (B, N, rnn_units), dtype=jnp.float32)
    # row-normalized adjacency (like a norm_adj)
    A_raw = jax.random.uniform(k_a, (B, N, N), dtype=jnp.float32)
    A = A_raw / jnp.sum(A_raw, axis=-1, keepdims=True)

    params = init_params(k_p, input_dim, rnn_units)
    packed = pack_gcgru_params(params, input_dim, rnn_units)   # packed ONCE, reused per step

    h_new = gcgru_cell(x, h, A, *packed)
    jax.block_until_ready(h_new)

    h_ref = gcgru_reference(x, h, A, params)
    assert h_new.shape == (B, N, rnn_units)
    # bf16 operands with f32 accumulation: relaxed tolerance vs the f32 reference
    assert jnp.allclose(h_new, h_ref, atol=5e-2, rtol=5e-2), \
        float(jnp.max(jnp.abs(h_new - h_ref)))

    print("KERNEL_OK")
</pallas_src>

<mosaic_0001>
module attributes {stable_mosaic.version = 11 : i64} {
  func.func @_gcgru_kernel(%arg0: i32, %arg1: memref<2x16x128xbf16, #tpu.memory_space<vmem>>, %arg2: memref<2x16x32xbf16, #tpu.memory_space<vmem>>, %arg3: memref<2x16x16xbf16, #tpu.memory_space<vmem>>, %arg4: memref<128x128xbf16, #tpu.memory_space<vmem>>, %arg5: memref<32x32xbf16, #tpu.memory_space<vmem>>, %arg6: memref<1x128xf32, #tpu.memory_space<vmem>>, %arg7: memref<2x16x32xf32, #tpu.memory_space<vmem>>) attributes {dimension_semantics = [#tpu.dimension_semantics<parallel>], iteration_bounds = array<i64: 1>, scalar_prefetch = 0 : i64, scratch_operands = 0 : i64, tpu.core_type = #tpu.core_type<tc>, window_params = [{transform_indices = @transform_0, window_bounds = array<i64: 2, 16, 128>}, {transform_indices = @transform_1, window_bounds = array<i64: 2, 16, 32>}, {transform_indices = @transform_2, window_bounds = array<i64: 2, 16, 16>}, {pipeline_mode = #tpu.pipeline_mode<synchronous>, transform_indices = @transform_3, window_bounds = array<i64: 128, 128>}, {pipeline_mode = #tpu.pipeline_mode<synchronous>, transform_indices = @transform_4, window_bounds = array<i64: 32, 32>}, {pipeline_mode = #tpu.pipeline_mode<synchronous>, transform_indices = @transform_5, window_bounds = array<i64: 1, 128>}, {transform_indices = @transform_6, window_bounds = array<i64: 2, 16, 32>}]} {
    %c0 = arith.constant 0 : index
    %c0_0 = arith.constant 0 : index
    %c0_1 = arith.constant 0 : index
    %0 = vector.load %arg1[%c0, %c0_0, %c0_1] : memref<2x16x128xbf16, #tpu.memory_space<vmem>>, vector<2x16x128xbf16>
    %c0_2 = arith.constant 0 : index
    %c0_3 = arith.constant 0 : index
    %c0_4 = arith.constant 0 : index
    %1 = vector.load %arg2[%c0_2, %c0_3, %c0_4] : memref<2x16x32xbf16, #tpu.memory_space<vmem>>, vector<2x16x32xbf16>
    %c0_5 = arith.constant 0 : index
    %c0_6 = arith.constant 0 : index
    %c0_7 = arith.constant 0 : index
    %2 = vector.load %arg3[%c0_5, %c0_6, %c0_7] : memref<2x16x16xbf16, #tpu.memory_space<vmem>>, vector<2x16x16xbf16>
    %c0_8 = arith.constant 0 : index
    %c0_9 = arith.constant 0 : index
    %3 = vector.load %arg4[%c0_8, %c0_9] : memref<128x128xbf16, #tpu.memory_space<vmem>>, vector<128x128xbf16>
    %c0_10 = arith.constant 0 : index
    %c0_11 = arith.constant 0 : index
    %4 = vector.load %arg5[%c0_10, %c0_11] : memref<32x32xbf16, #tpu.memory_space<vmem>>, vector<32x32xbf16>
    %c0_12 = arith.constant 0 : index
    %c0_13 = arith.constant 0 : index
    %5 = vector.load %arg6[%c0_12, %c0_13] : memref<1x128xf32, #tpu.memory_space<vmem>>, vector<1x128xf32>
    %6 = arith.extf %1 : vector<2x16x32xbf16> to vector<2x16x32xf32>
    "tpu.trace_start"() <{level = 10 : i32, message = "bij,bjk->bik"}> : () -> ()
    %cst = arith.constant dense<0.000000e+00> : vector<2x16x128xf32>
    %7 = tpu.matmul %2, %0, %cst {dimension_numbers = #tpu.dot_dimension_numbers<[2], [1], [1], [2], [0, 0, 0, 1, 1, 2], [0], [0]>} : vector<2x16x16xbf16>, vector<2x16x128xbf16>, vector<2x16x128xf32> -> vector<2x16x128xf32>
    "tpu.trace_stop"() : () -> ()
    %8 = arith.truncf %7 : vector<2x16x128xf32> to vector<2x16x128xbf16>
    %9 = vector.shape_cast %8 : vector<2x16x128xbf16> to vector<32x128xbf16>
    %cst_14 = arith.constant dense<0.000000e+00> : vector<32x128xf32>
    %10 = tpu.matmul %9, %3, %cst_14 {dimension_numbers = #tpu.dot_dimension_numbers<[1], [0], [0], [1], [0, 0, 1, 1], [], []>} : vector<32x128xbf16>, vector<128x128xbf16>, vector<32x128xf32> -> vector<32x128xf32>
    %11 = vector.shape_cast %10 : vector<32x128xf32> to vector<2x16x128xf32>
    %12 = vector.shape_cast %5 : vector<1x128xf32> to vector<1x1x128xf32>
    %13 = vector.broadcast %12 : vector<1x1x128xf32> to vector<2x16x128xf32>
    %14 = arith.addf %11, %13 : vector<2x16x128xf32>
    %15 = vector.extract_strided_slice %14 {offsets = [0, 0, 0], sizes = [2, 16, 64], strides = [1, 1, 1]} : vector<2x16x128xf32> to vector<2x16x64xf32>
    %cst_15 = arith.constant 5.000000e-01 : f32
    %16 = vector.broadcast %cst_15 : f32 to vector<2x16x64xf32>
    %17 = arith.mulf %16, %15 : vector<2x16x64xf32>
    %18 = math.tanh %17 : vector<2x16x64xf32>
    %cst_16 = arith.constant 5.000000e-01 : f32
    %19 = vector.broadcast %cst_16 : f32 to vector<2x16x64xf32>
    %20 = arith.mulf %19, %18 : vector<2x16x64xf32>
    %cst_17 = arith.constant 5.000000e-01 : f32
    %21 = vector.broadcast %cst_17 : f32 to vector<2x16x64xf32>
    %22 = arith.addf %20, %21 : vector<2x16x64xf32>
    %23 = vector.extract_strided_slice %22 {offsets = [0, 0, 0], sizes = [2, 16, 32], strides = [1, 1, 1]} : vector<2x16x64xf32> to vector<2x16x32xf32>
    %24 = vector.extract_strided_slice %22 {offsets = [0, 0, 32], sizes = [2, 16, 32], strides = [1, 1, 1]} : vector<2x16x64xf32> to vector<2x16x32xf32>
    %25 = vector.extract_strided_slice %14 {offsets = [0, 0, 64], sizes = [2, 16, 32], strides = [1, 1, 1]} : vector<2x16x128xf32> to vector<2x16x32xf32>
    %26 = arith.mulf %23, %6 : vector<2x16x32xf32>
    %27 = arith.truncf %26 : vector<2x16x32xf32> to vector<2x16x32xbf16>
    "tpu.trace_start"() <{level = 10 : i32, message = "bij,bjk->bik"}> : () -> ()
    %cst_18 = arith.constant dense<0.000000e+00> : vector<2x16x32xf32>
    %28 = tpu.matmul %2, %27, %cst_18 {dimension_numbers = #tpu.dot_dimension_numbers<[2], [1], [1], [2], [0, 0, 0, 1, 1, 2], [0], [0]>} : vector<2x16x16xbf16>, vector<2x16x32xbf16>, vector<2x16x32xf32> -> vector<2x16x32xf32>
    "tpu.trace_stop"() : () -> ()
    %29 = arith.truncf %28 : vector<2x16x32xf32> to vector<2x16x32xbf16>
    %30 = vector.shape_cast %29 : vector<2x16x32xbf16> to vector<32x32xbf16>
    %cst_19 = arith.constant dense<0.000000e+00> : vector<32x32xf32>
    %31 = tpu.matmul %30, %4, %cst_19 {dimension_numbers = #tpu.dot_dimension_numbers<[1], [0], [0], [1], [0, 0, 1, 1], [], []>} : vector<32x32xbf16>, vector<32x32xbf16>, vector<32x32xf32> -> vector<32x32xf32>
    %32 = vector.shape_cast %31 : vector<32x32xf32> to vector<2x16x32xf32>
    %33 = arith.addf %25, %32 : vector<2x16x32xf32>
    %34 = math.tanh %33 : vector<2x16x32xf32>
    %35 = arith.mulf %24, %6 : vector<2x16x32xf32>
    %cst_20 = arith.constant 1.000000e+00 : f32
    %36 = vector.broadcast %cst_20 : f32 to vector<2x16x32xf32>
    %37 = arith.subf %36, %24 : vector<2x16x32xf32>
    %38 = arith.mulf %37, %34 : vector<2x16x32xf32>
    %39 = arith.addf %35, %38 : vector<2x16x32xf32>
    %c0_21 = arith.constant 0 : index
    %c0_22 = arith.constant 0 : index
    %c0_23 = arith.constant 0 : index
    %40 = vector.load %arg7[%c0_21, %c0_22, %c0_23] : memref<2x16x32xf32, #tpu.memory_space<vmem>>, vector<2x16x32xf32>
    tpu.vector_store %arg7[%c0_21, %c0_22, %c0_23], %39 {strides = array<i32>} : memref<2x16x32xf32, #tpu.memory_space<vmem>>, vector<2x16x32xf32>,
    return
  }
  func.func @transform_0(%arg0: i32) -> (i32, i32, i32) {
    %c0_i32 = arith.constant 0 : i32
    %c0_i32_0 = arith.constant 0 : i32
    %c0_i32_1 = arith.constant 0 : i32
    return %arg0, %c0_i32, %c0_i32_0 : i32, i32, i32
  }
  func.func @transform_1(%arg0: i32) -> (i32, i32, i32) {
    %c0_i32 = arith.constant 0 : i32
    %c0_i32_0 = arith.constant 0 : i32
    %c0_i32_1 = arith.constant 0 : i32
    return %arg0, %c0_i32, %c0_i32_0 : i32, i32, i32
  }
  func.func @transform_2(%arg0: i32) -> (i32, i32, i32) {
    %c0_i32 = arith.constant 0 : i32
    %c0_i32_0 = arith.constant 0 : i32
    %c0_i32_1 = arith.constant 0 : i32
    return %arg0, %c0_i32, %c0_i32_0 : i32, i32, i32
  }
  func.func @transform_3(%arg0: i32) -> (i32, i32) {
    %c0_i32 = arith.constant 0 : i32
    %c0_i32_0 = arith.constant 0 : i32
    %c0_i32_1 = arith.constant 0 : i32
    return %c0_i32, %c0_i32_0 : i32, i32
  }
  func.func @transform_4(%arg0: i32) -> (i32, i32) {
    %c0_i32 = arith.constant 0 : i32
    %c0_i32_0 = arith.constant 0 : i32
    %c0_i32_1 = arith.constant 0 : i32
    return %c0_i32, %c0_i32_0 : i32, i32
  }
  func.func @transform_5(%arg0: i32) -> (i32, i32) {
    %c0_i32 = arith.constant 0 : i32
    %c0_i32_0 = arith.constant 0 : i32
    %c0_i32_1 = arith.constant 0 : i32
    return %c0_i32, %c0_i32_0 : i32, i32
  }
  func.func @transform_6(%arg0: i32) -> (i32, i32, i32) {
    %c0_i32 = arith.constant 0 : i32
    %c0_i32_0 = arith.constant 0 : i32
    %c0_i32_1 = arith.constant 0 : i32
    return %arg0, %c0_i32, %c0_i32_0 : i32, i32, i32
  }
}

</mosaic_0001>

<llo_original>
// kernel: gcgru_cell.1
$region0: #{gcgru_cell.1}
  #allocation0 [shape = 'u32[]', space=smem, size = 0x4, offset = 0x4, fixed_abs, tag = 'smem constant byte address 0x4 - core index']
  #allocation1 [shape = 'u32[72,128]{1,0:T(1,128)}', space=vmem, size = 0x9000, scoped, tag = 'internal scratch']
  %s0 = inlined_call_operand.vmem [shape: bf16[2,16,128], index: 0, kind: input, shape index: {}]
  %s1 = inlined_call_operand.vmem [shape: bf16[2,16,32], index: 1, kind: input, shape index: {}]
  %s2 = inlined_call_operand.vmem [shape: bf16[2,16,16], index: 2, kind: input, shape index: {}]
  %s3 = inlined_call_operand.vmem [shape: bf16[128,128], index: 3, kind: input, shape index: {}]
  %s4 = inlined_call_operand.vmem [shape: bf16[32,32], index: 4, kind: input, shape index: {}]
  %s5 = inlined_call_operand.vmem [shape: f32[1,128], index: 5, kind: input, shape index: {}]
  %s6 = inlined_call_operand.hbm [shape: f32[2,16,32], index: 6, kind: output, shape index: {}]
  %s7 = sld [smem:[#allocation0]]
  $region34: #{gcgru_cell.1} parent=0
    _
  %s9 = ssub.s32 1, %s7
  %s10 = scalar_select 0, %s9, %s7
  $region1: #{gcgru_cell.1} parent=0
    #allocation2 [shape = 'u8[16384]{0}', space=vmem, size = 0x4000, scoped, tag = 'output window, operand 0, single buffered']
    #allocation3 [shape = 's32[1]{0}', space=sflag, size = 0x4, scoped, tag = 'scoped memory for gcgru_cell.1']
    %11 = vsyncpa [#allocation3], 0
    // Predicated region
    $region2: #{gcgru_cell.1} parent=1 // pred_check
      _
    $region3: #{gcgru_cell.1} parent=1 // pred_check_branch
      %13 = sbr.rel (0) target = $region5
    $region4: #{gcgru_cell.1} parent=1 // pred_region
      _
    $region5: #{gcgru_cell.1} parent=1 // pred_fallthru
      _
    // Predicated region
    $region6: #{gcgru_cell.1} parent=1 // pred_check
      _
    $region7: #{gcgru_cell.1} parent=1 // pred_check_branch
      %15 = sbr.rel (0) target = $region9
    $region8: #{gcgru_cell.1} parent=1 // pred_region
      _
    $region9: #{gcgru_cell.1} parent=1 // pred_fallthru
      _
    // Predicated region
    $region10: #{gcgru_cell.1} parent=1 // pred_check
      _
    $region11: #{gcgru_cell.1} parent=1 // pred_check_branch
      %17 = sbr.rel (0) target = $region13
    $region12: #{gcgru_cell.1} parent=1 // pred_region
      _
    $region13: #{gcgru_cell.1} parent=1 // pred_fallthru
      _
    // Predicated region
    $region14: #{gcgru_cell.1} parent=1 // pred_check
      _
    $region15: #{gcgru_cell.1} parent=1 // pred_check_branch
      %19 = sbr.rel (0) target = $region17
    $region16: #{gcgru_cell.1} parent=1 // pred_region
      _
    $region17: #{gcgru_cell.1} parent=1 // pred_fallthru
      _
    // Predicated region
    $region18: #{gcgru_cell.1} parent=1 // pred_check
      _
    $region19: #{gcgru_cell.1} parent=1 // pred_check_branch
      %21 = sbr.rel (0) target = $region21
    $region20: #{gcgru_cell.1} parent=1 // pred_region
      _
    $region21: #{gcgru_cell.1} parent=1 // pred_fallthru
      _
    // Predicated region
    $region22: #{gcgru_cell.1} parent=1 // pred_check
      _
    $region23: #{gcgru_cell.1} parent=1 // pred_check_branch
      %23 = sbr.rel (0) target = $region25
    $region24: #{gcgru_cell.1} parent=1 // pred_region
      _
    $region25: #{gcgru_cell.1} parent=1 // pred_fallthru
      _
    %v25 = vld [vmem:[%s0] sm:$0xf]
    %v26 = vld [vmem:[%s0 + $0x4] sm:$0xf]
    %v27 = vld [vmem:[%s0 + $0x8] sm:$0xf]
    %v28 = vld [vmem:[%s0 + $0xc] sm:$0xf]
    %v29 = vld [vmem:[%s1] sm:$0xf]
    %v30 = vld [vmem:[%s1 + $0x4] sm:$0xf]
    %v31 = vld [vmem:[%s1 + $0x8] sm:$0xf]
    %v32 = vld [vmem:[%s1 + $0xc] sm:$0xf]
    %v33 = vld [vmem:[%s2] sm:$0xf]
    %v34 = vld [vmem:[%s2 + $0x4] sm:$0xf]
    %v35 = vld [vmem:[%s2 + $0x8] sm:$0xf]
    %v36 = vld [vmem:[%s2 + $0xc] sm:$0xf]
    %v37 = vld [vmem:[%s3] sm:$0xf]
    %v38 = vld [vmem:[%s3 + $0x4] sm:$0xf]
    %v39 = vld [vmem:[%s3 + $0x8] sm:$0xf]
    %v40 = vld [vmem:[%s3 + $0xc] sm:$0xf]
    %v41 = vld [vmem:[%s3 + $0x10] sm:$0xf]
    %v42 = vld [vmem:[%s3 + $0x14] sm:$0xf]
    %v43 = vld [vmem:[%s3 + $0x18] sm:$0xf]
    %v44 = vld [vmem:[%s3 + $0x1c] sm:$0xf]
    %v45 = vld [vmem:[%s3 + $0x20] sm:$0xf]
    %v46 = vld [vmem:[%s3 + $0x24] sm:$0xf]
    %v47 = vld [vmem:[%s3 + $0x28] sm:$0xf]
    %v48 = vld [vmem:[%s3 + $0x2c] sm:$0xf]
    %v49 = vld [vmem:[%s3 + $0x30] sm:$0xf]
    %v50 = vld [vmem:[%s3 + $0x34] sm:$0xf]
    %v51 = vld [vmem:[%s3 + $0x38] sm:$0xf]
    %v52 = vld [vmem:[%s3 + $0x3c] sm:$0xf]
    %v53 = vld [vmem:[%s4] sm:$0xf]
    %v54 = vld [vmem:[%s4 + $0x4] sm:$0xf]
    %v55 = vld [vmem:[%s4 + $0x8] sm:$0xf]
    %v56 = vld [vmem:[%s4 + $0xc] sm:$0xf]
    %v57 = vld [vmem:[%s5] sm:$0x1]
    %v58 = vunpack.c.l.bf16 %v29
    %v59 = vunpack.c.l.bf16 %v30
    %v60 = vunpack.c.l.bf16 %v31
    %v61 = vunpack.c.l.bf16 %v32
    %v64 = vunpack.c.l.b16 %v33
    %v65 = vunpack.c.l.b16 %v34
    %v66 = vpack.c.b16 %v65, %v64
    %v69 = vunpack.c.l.b16 %v25
    %v70 = vunpack.c.l.b16 %v26
    %v71 = vpack.c.b16 %v70, %v69
    %vm73 = vcmask 130048
    %v75 = vsel %vm73, %v66, 0
    %77 = vmatpush.bf16.msra.mxu0 0
    %78 = vmatpush.bf16.msra.mxu0 0
    %79 = vmatpush.bf16.msra.mxu0 0
    %80 = vmatpush.bf16.msra.mxu0 0
    %81 = vmatpush.bf16.msra.mxu0 0
    %82 = vmatpush.bf16.msra.mxu0 0
    %83 = vmatpush.bf16.msra.mxu0 0
    %84 = vmatpush.bf16.msra.mxu0 %v71
    %85 = vmatmul.bf16.gmra.mxu0 %v75
    %v86 = vpop.f32.mrf.mxu0
    %v87 = vadd.f32 0.0, %v86
    %v88 = vpop.f32.mrf.mxu0
    %v89 = vadd.f32 0.0, %v88
    %90 = vdwg.mxu0
    %v93 = vunpack.c.l.b16 %v35
    %v94 = vunpack.c.l.b16 %v36
    %v95 = vpack.c.b16 %v94, %v93
    %v98 = vunpack.c.l.b16 %v27
    %v99 = vunpack.c.l.b16 %v28
    %v100 = vpack.c.b16 %v99, %v98
    %v103 = vsel %vm73, %v95, 0
    %105 = vmatpush.bf16.msra.mxu0 0
    %106 = vmatpush.bf16.msra.mxu0 0
    %107 = vmatpush.bf16.msra.mxu0 0
    %108 = vmatpush.bf16.msra.mxu0 0
    %109 = vmatpush.bf16.msra.mxu0 0
    %110 = vmatpush.bf16.msra.mxu0 0
    %111 = vmatpush.bf16.msra.mxu0 0
    %112 = vmatpush.bf16.msra.mxu0 %v100
    %113 = vmatmul.bf16.gmra.mxu0 %v103
    %v114 = vpop.f32.mrf.mxu0
    %v115 = vadd.f32 0.0, %v114
    %v116 = vpop.f32.mrf.mxu0
    %v117 = vadd.f32 0.0, %v116
    %118 = vdwg.mxu0
    %v119 = vpack.c.bf16 %v87, %v87
    %v120 = vpack.c.bf16 %v89, %v89
    %v121 = vpack.c.bf16 %v115, %v115
    %v122 = vpack.c.bf16 %v117, %v117
    %v127 = vunpack.c.l.b16 %v119
    %v128 = vunpack.c.l.b16 %v120
    %v129 = vunpack.c.l.b16 %v121
    %v130 = vunpack.c.l.b16 %v122
    %v131 = vpack.c.b16 %v128, %v127
    %v132 = vpack.c.b16 %v130, %v129
    %v151 = vunpack.c.l.b16 %v37
    %v152 = vunpack.c.l.b16 %v38
    %v153 = vunpack.c.l.b16 %v39
    %v154 = vunpack.c.l.b16 %v40
    %v155 = vunpack.c.l.b16 %v41
    %v156 = vunpack.c.l.b16 %v42
    %v157 = vunpack.c.l.b16 %v43
    %v158 = vunpack.c.l.b16 %v44
    %v159 = vunpack.c.l.b16 %v45
    %v160 = vunpack.c.l.b16 %v46
    %v161 = vunpack.c.l.b16 %v47
    %v162 = vunpack.c.l.b16 %v48
    %v163 = vunpack.c.l.b16 %v49
    %v164 = vunpack.c.l.b16 %v50
    %v165 = vunpack.c.l.b16 %v51
    %v166 = vunpack.c.l.b16 %v52
    %v167 = vpack.c.b16 %v152, %v151
    %v168 = vpack.c.b16 %v154, %v153
    %v169 = vpack.c.b16 %v156, %v155
    %v170 = vpack.c.b16 %v158, %v157
    %v171 = vpack.c.b16 %v160, %v159
    %v172 = vpack.c.b16 %v162, %v161
    %v173 = vpack.c.b16 %v164, %v163
    %v174 = vpack.c.b16 %v166, %v165
    %183 = vmatpush.bf16.msra.mxu0 %v174
    %184 = vmatpush.bf16.msra.mxu0 %v173
    %185 = vmatpush.bf16.msra.mxu0 %v172
    %186 = vmatpush.bf16.msra.mxu0 %v171
    %187 = vmatpush.bf16.msra.mxu0 %v170
    %188 = vmatpush.bf16.msra.mxu0 %v169
    %189 = vmatpush.bf16.msra.mxu0 %v168
    %190 = vmatpush.bf16.msra.mxu0 %v167
    %191 = vmatmul.bf16.gmra.mxu0 %v131
    %v192 = vpop.f32.mrf.mxu0
    %v193 = vadd.f32 0.0, %v192
    %v194 = vpop.f32.mrf.mxu0
    %v195 = vadd.f32 0.0, %v194
    %196 = vmatmul.bf16.gmra.mxu0 %v132
    %v197 = vpop.f32.mrf.mxu0
    %v198 = vadd.f32 0.0, %v197
    %v199 = vpop.f32.mrf.mxu0
    %v200 = vadd.f32 0.0, %v199
    %201 = vdwg.mxu0
    %v203 = vperm.slane %v57, 0
    %v205 = vadd.f32 %v193, %v203
    %v206 = vadd.f32 %v195, %v203
    %v207 = vadd.f32 %v198, %v203
    %v208 = vadd.f32 %v200, %v203
    %v209 = vmul.f32 %v205, 0.5
    %v210 = vmul.f32 %v206, 0.5
    %v211 = vmul.f32 %v207, 0.5
    %v212 = vmul.f32 %v208, 0.5
    %v213 = vtanh.pop %v209
    %v214 = vtanh.pop %v210
    %v215 = vtanh.pop %v211
    %v216 = vtanh.pop %v212
    %v217 = vmul.f32 %v213, 0.5
    %v218 = vmul.f32 %v214, 0.5
    %v219 = vmul.f32 %v215, 0.5
    %v220 = vmul.f32 %v216, 0.5
    %v221 = vadd.f32 %v217, 0.5
    %v222 = vadd.f32 %v218, 0.5
    %v223 = vadd.f32 %v219, 0.5
    %v224 = vadd.f32 %v220, 0.5
    %v225 = vmul.f32 %v221, %v58
    %v226 = vmul.f32 %v222, %v59
    %v227 = vmul.f32 %v223, %v60
    %v228 = vmul.f32 %v224, %v61
    %v229 = vpack.c.bf16 %v225, %v225
    %v230 = vpack.c.bf16 %v226, %v226
    %v231 = vpack.c.bf16 %v227, %v227
    %v232 = vpack.c.bf16 %v228, %v228
    %v235 = vunpack.c.l.b16 %v229
    %v236 = vunpack.c.l.b16 %v230
    %v237 = vpack.c.b16 %v236, %v235
    %239 = vmatpush.bf16.msra.mxu0 0
    %240 = vmatpush.bf16.msra.mxu0 0
    %241 = vmatpush.bf16.msra.mxu0 0
    %242 = vmatpush.bf16.msra.mxu0 0
    %243 = vmatpush.bf16.msra.mxu0 0
    %244 = vmatpush.bf16.msra.mxu0 0
    %245 = vmatpush.bf16.msra.mxu0 0
    %246 = vmatpush.bf16.msra.mxu0 %v237
    %247 = vmatmul.bf16.gmra.mxu0 %v75
    %v248 = vpop.f32.mrf.mxu0
    %v249 = vadd.f32 0.0, %v248
    %v250 = vpop.f32.mrf.mxu0
    %v251 = vadd.f32 0.0, %v250
    %252 = vdwg.mxu0
    %v255 = vunpack.c.l.b16 %v231
    %v256 = vunpack.c.l.b16 %v232
    %v257 = vpack.c.b16 %v256, %v255
    %259 = vmatpush.bf16.msra.mxu0 0
    %260 = vmatpush.bf16.msra.mxu0 0
    %261 = vmatpush.bf16.msra.mxu0 0
    %262 = vmatpush.bf16.msra.mxu0 0
    %263 = vmatpush.bf16.msra.mxu0 0
    %264 = vmatpush.bf16.msra.mxu0 0
    %265 = vmatpush.bf16.msra.mxu0 0
    %266 = vmatpush.bf16.msra.mxu0 %v257
    %267 = vmatmul.bf16.gmra.mxu0 %v103
    %v268 = vpop.f32.mrf.mxu0
    %v269 = vadd.f32 0.0, %v268
    %v270 = vpop.f32.mrf.mxu0
    %v271 = vadd.f32 0.0, %v270
    %272 = vdwg.mxu0
    %v273 = vpack.c.bf16 %v249, %v249
    %v274 = vpack.c.bf16 %v251, %v251
    %v275 = vpack.c.bf16 %v269, %v269
    %v276 = vpack.c.bf16 %v271, %v271
    %v281 = vunpack.c.l.b16 %v273
    %v282 = vunpack.c.l.b16 %v274
    %v283 = vunpack.c.l.b16 %v275
    %v284 = vunpack.c.l.b16 %v276
    %v285 = vpack.c.b16 %v282, %v281
    %v286 = vpack.c.b16 %v284, %v283
    %v291 = vunpack.c.l.b16 %v53
    %v292 = vunpack.c.l.b16 %v54
    %v293 = vunpack.c.l.b16 %v55
    %v294 = vunpack.c.l.b16 %v56
    %v295 = vpack.c.b16 %v292, %v291
    %v296 = vpack.c.b16 %v294, %v293
    %vm299 = vcmask 261120
    %v301 = vsel %vm299, %v285, 0
    %v304 = vsel %vm299, %v286, 0
    %306 = vmatpush.bf16.msra.mxu0 0
    %307 = vmatpush.bf16.msra.mxu0 0
    %308 = vmatpush.bf16.msra.mxu0 0
    %309 = vmatpush.bf16.msra.mxu0 0
    %310 = vmatpush.bf16.msra.mxu0 0
    %311 = vmatpush.bf16.msra.mxu0 0
    %312 = vmatpush.bf16.msra.mxu0 %v296
    %313 = vmatpush.bf16.msra.mxu0 %v295
    %314 = vmatmul.bf16.gmra.mxu0 %v301
    %v315 = vpop.f32.mrf.mxu0
    %v316 = vadd.f32 0.0, %v315
    %v317 = vpop.f32.mrf.mxu0
    %v318 = vadd.f32 0.0, %v317
    %319 = vmatmul.bf16.gmra.mxu0 %v304
    %v320 = vpop.f32.mrf.mxu0
    %v321 = vadd.f32 0.0, %v320
    %v322 = vpop.f32.mrf.mxu0
    %v323 = vadd.f32 0.0, %v322
    %324 = vdwg.mxu0
    %329 = vrot.lane.b32.xlu0 %v316, 64
    %v330 = vpop.permute.xlu0 %329
    %331 = vrot.lane.b32.xlu0 %v318, 64
    %v332 = vpop.permute.xlu0 %331
    %333 = vrot.lane.b32.xlu0 %v321, 64
    %v334 = vpop.permute.xlu0 %333
    %335 = vrot.lane.b32.xlu0 %v323, 64
    %v336 = vpop.permute.xlu0 %335
    %v341 = vadd.f32 %v205, %v330
    %v342 = vadd.f32 %v206, %v332
    %v343 = vadd.f32 %v207, %v334
    %v344 = vadd.f32 %v208, %v336
    %v345 = vtanh.pop %v341
    %v346 = vtanh.pop %v342
    %v347 = vtanh.pop %v343
    %v348 = vtanh.pop %v344
    %353 = vrot.lane.b32.xlu0 %v58, 32
    %v354 = vpop.permute.xlu0 %353
    %355 = vrot.lane.b32.xlu0 %v59, 32
    %v356 = vpop.permute.xlu0 %355
    %357 = vrot.lane.b32.xlu0 %v60, 32
    %v358 = vpop.permute.xlu0 %357
    %359 = vrot.lane.b32.xlu0 %v61, 32
    %v360 = vpop.permute.xlu0 %359
    %v365 = vmul.f32 %v221, %v354
    %v366 = vmul.f32 %v222, %v356
    %v367 = vmul.f32 %v223, %v358
    %v368 = vmul.f32 %v224, %v360
    %v369 = vsub.f32 1.0, %v221
    %v370 = vsub.f32 1.0, %v222
    %v371 = vsub.f32 1.0, %v223
    %v372 = vsub.f32 1.0, %v224
    %377 = vrot.lane.b32.xlu0 %v345, 96
    %v378 = vpop.permute.xlu0 %377
    %379 = vrot.lane.b32.xlu0 %v346, 96
    %v380 = vpop.permute.xlu0 %379
    %381 = vrot.lane.b32.xlu0 %v347, 96
    %v382 = vpop.permute.xlu0 %381
    %383 = vrot.lane.b32.xlu0 %v348, 96
    %v384 = vpop.permute.xlu0 %383
    %v389 = vmul.f32 %v369, %v378
    %v390 = vmul.f32 %v370, %v380
    %v391 = vmul.f32 %v371, %v382
    %v392 = vmul.f32 %v372, %v384
    %v393 = vadd.f32 %v365, %v389
    %v394 = vadd.f32 %v366, %v390
    %v395 = vadd.f32 %v367, %v391
    %v396 = vadd.f32 %v368, %v392
    %401 = vrot.lane.b32.xlu0 %v393, 96
    %v402 = vpop.permute.xlu0 %401
    %403 = vrot.lane.b32.xlu0 %v394, 96
    %v404 = vpop.permute.xlu0 %403
    %405 = vrot.lane.b32.xlu0 %v395, 96
    %v406 = vpop.permute.xlu0 %405
    %407 = vrot.lane.b32.xlu0 %v396, 96
    %v408 = vpop.permute.xlu0 %407
    %413 = vst.msk [vmem:[#allocation2] sm:$0xff] %vm299, %v402
    %414 = vst.msk [vmem:[#allocation2 + $0x8] sm:$0xff] %vm299, %v404
    %415 = vst.msk [vmem:[#allocation2 + $0x10] sm:$0xff] %vm299, %v406
    %416 = vst.msk [vmem:[#allocation2 + $0x18] sm:$0xff] %vm299, %v408
    // Predicated region
    $region26: #{gcgru_cell.1} parent=1 // pred_check
      _
    $region27: #{gcgru_cell.1} parent=1 // pred_check_branch
      %418 = sbr.rel (0) target = $region29
    $region28: #{gcgru_cell.1} parent=1 // pred_region
      %420 = vsyncadd [#allocation3], 0
      %s421 = sshll.u32 [#allocation2], 4
      %s422 = int_to_ptr.vmem [resolvable:$true] %s421
      %s423 = sshll.u32 %s6, 4
      %s424 = int_to_ptr.hbm [resolvable:$true] %s423
      %429 = dma.vmem_to_hbm [thread:$0]  %s422, 512, %s424, [#allocation3], 128, 128, 8
    $region29: #{gcgru_cell.1} parent=1 // pred_fallthru
      _
    // Predicated region
    $region30: #{gcgru_cell.1} parent=1 // pred_check
      _
    $region31: #{gcgru_cell.1} parent=1 // pred_check_branch
      %431 = sbr.rel (0) target = $region33
    $region32: #{gcgru_cell.1} parent=1 // pred_region
      %433 = dma.done [#allocation3], 512
    $region33: #{gcgru_cell.1} parent=1 // pred_fallthru
      _
    %434 = vsyncpa [#allocation3], 1

</llo_original>
